<compile_context>
chip_gen: v7x
topology: tpu7x:2x2x1
jax: 0.10.0
libtpu: 0.0.40
codegen_flags: <defaults>
</compile_context>

<pallas_src>
import functools
import numpy as np
import jax
import jax.numpy as jnp
from jax.experimental import pallas as pl
from jax.experimental.pallas import tpu as pltpu

# ----------------------------- configuration -----------------------------
B = 1
IN_CH = 1
OUT_CH = 2
IMG = (32, 32, 32)          # must be divisible by 2**5 (SwinUNETR constraint)
FEATURE_SIZE = 12           # must be divisible by 12
DEPTHS = (1, 1, 1, 1)       # one (non-shifted) Swin block per stage
NUM_HEADS = (3, 6, 12, 24)
WINDOW = (7, 7, 7)
MLP_RATIO = 4.0
EPS = 1e-5
_SQRT_HALF = 0.7071067811865476


def _round_up(x, m):
    return ((x + m - 1) // m) * m


def _choose_tm(m, cap=512):
    return min(cap, _round_up(m, 8))


def _apply_act(x, act):
    if act == "gelu":
        return 0.5 * x * (1.0 + jax.lax.erf(x * _SQRT_HALF))   # exact GELU (erf)
    if act == "lrelu":
        return jnp.where(x >= 0, x, 0.01 * x)
    return x


# ----------------------------- matmul kernels (bf16 MXU, fused epilogues) ---
def _mm_kernel(a_ref, b_ref, bias_ref, *rest, act, has_res):
    if has_res:
        res_ref, o_ref = rest
    else:
        (o_ref,) = rest
    acc = jnp.dot(a_ref[...], b_ref[...], preferred_element_type=jnp.float32)
    acc = acc + bias_ref[...]
    acc = _apply_act(acc, act)
    if has_res:
        acc = acc + res_ref[...]
    o_ref[...] = acc


def matmul(a, b, bias=None, act=None, residual=None):
    """a (M,K) @ b (K,N) + bias, optional fused activation / residual add."""
    M, K = a.shape
    K2, N = b.shape
    assert K == K2
    if K < 8:                                   # keep MXU contraction >= 8 wide
        a = jnp.pad(a, ((0, 0), (0, 8 - K)))
        b = jnp.pad(b, ((0, 8 - K), (0, 0)))
        K = 8
    tm = _choose_tm(M)
    Mp = _round_up(M, tm)
    a = a.astype(jnp.bfloat16)
    if Mp != M:
        a = jnp.pad(a, ((0, Mp - M), (0, 0)))
    bias2 = (jnp.zeros((1, N), jnp.float32) if bias is None
             else bias.astype(jnp.float32).reshape(1, N))
    has_res = residual is not None
    args = [a, b.astype(jnp.bfloat16), bias2]
    in_specs = [pl.BlockSpec((tm, K), lambda i: (i, 0)),
                pl.BlockSpec((K, N), lambda i: (0, 0)),
                pl.BlockSpec((1, N), lambda i: (0, 0))]
    if has_res:
        r = residual.astype(jnp.float32)
        if Mp != M:
            r = jnp.pad(r, ((0, Mp - M), (0, 0)))
        args.append(r)
        in_specs.append(pl.BlockSpec((tm, N), lambda i: (i, 0)))
    out = pl.pallas_call(
        functools.partial(_mm_kernel, act=act, has_res=has_res),
        grid=(Mp // tm,),
        in_specs=in_specs,
        out_specs=pl.BlockSpec((tm, N), lambda i: (i, 0)),
        out_shape=jax.ShapeDtypeStruct((Mp, N), jnp.float32),
        compiler_params=pltpu.CompilerParams(dimension_semantics=("parallel",)),
    )(*args)
    return out[:M] if Mp != M else out


def _ln_mm_kernel(x_ref, g_ref, be_ref, w_ref, bias_ref, o_ref, *, act):
    x = x_ref[...]
    mean = jnp.mean(x, axis=-1, keepdims=True)
    var = jnp.mean(jnp.square(x - mean), axis=-1, keepdims=True)
    xn = (x - mean) * jax.lax.rsqrt(var + EPS) * g_ref[...] + be_ref[...]
    acc = jnp.dot(xn.astype(jnp.bfloat16), w_ref[...],
                  preferred_element_type=jnp.float32) + bias_ref[...]
    o_ref[...] = _apply_act(acc, act)


def ln_matmul(x, gamma, beta, w, bias=None, act=None):
    """Fused LayerNorm(x) @ w + bias (+activation).  x (M,K), w (K,N)."""
    M, K = x.shape
    K2, N = w.shape
    assert K == K2
    tm = _choose_tm(M)
    Mp = _round_up(M, tm)
    xp = x.astype(jnp.float32)
    if Mp != M:
        xp = jnp.pad(xp, ((0, Mp - M), (0, 0)))
    bias2 = (jnp.zeros((1, N), jnp.float32) if bias is None
             else bias.astype(jnp.float32).reshape(1, N))
    out = pl.pallas_call(
        functools.partial(_ln_mm_kernel, act=act),
        grid=(Mp // tm,),
        in_specs=[pl.BlockSpec((tm, K), lambda i: (i, 0)),
                  pl.BlockSpec((1, K), lambda i: (0, 0)),
                  pl.BlockSpec((1, K), lambda i: (0, 0)),
                  pl.BlockSpec((K, N), lambda i: (0, 0)),
                  pl.BlockSpec((1, N), lambda i: (0, 0))],
        out_specs=pl.BlockSpec((tm, N), lambda i: (i, 0)),
        out_shape=jax.ShapeDtypeStruct((Mp, N), jnp.float32),
        compiler_params=pltpu.CompilerParams(dimension_semantics=("parallel",)),
    )(xp, gamma.astype(jnp.float32).reshape(1, K),
      beta.astype(jnp.float32).reshape(1, K),
      w.astype(jnp.bfloat16), bias2)
    return out[:M] if Mp != M else out


# ----------------------------- layer norm (row-tiled) -----------------------
def _ln_kernel(x_ref, g_ref, b_ref, o_ref):
    x = x_ref[...]
    mean = jnp.mean(x, axis=-1, keepdims=True)
    var = jnp.mean(jnp.square(x - mean), axis=-1, keepdims=True)
    o_ref[...] = (x - mean) * jax.lax.rsqrt(var + EPS) * g_ref[...] + b_ref[...]


def layer_norm(x2d, gamma, beta):
    M, C = x2d.shape
    tm = _choose_tm(M, cap=1024)
    Mp = _round_up(M, tm)
    xp = x2d.astype(jnp.float32)
    if Mp != M:
        xp = jnp.pad(xp, ((0, Mp - M), (0, 0)))
    out = pl.pallas_call(
        _ln_kernel,
        grid=(Mp // tm,),
        in_specs=[pl.BlockSpec((tm, C), lambda i: (i, 0)),
                  pl.BlockSpec((1, C), lambda i: (0, 0)),
                  pl.BlockSpec((1, C), lambda i: (0, 0))],
        out_specs=pl.BlockSpec((tm, C), lambda i: (i, 0)),
        out_shape=jax.ShapeDtypeStruct((Mp, C), jnp.float32),
        compiler_params=pltpu.CompilerParams(dimension_semantics=("parallel",)),
    )(xp, gamma.astype(jnp.float32).reshape(1, C),
      beta.astype(jnp.float32).reshape(1, C))
    return out[:M] if Mp != M else out


# ----------------------------- instance norm (fused act / residual add) -----
# TODO(synk): the channel->row transpose is kept (lane-dense reduction axis);
# a fully channels-last two-pass IN would remove one HBM permute per call.
def _in_kernel(x_ref, o_ref, *, act):
    x = x_ref[...].astype(jnp.float32)                     # (B*C, S)
    mean = jnp.mean(x, axis=-1, keepdims=True)
    var = jnp.mean(jnp.square(x - mean), axis=-1, keepdims=True)
    y = (x - mean) * jax.lax.rsqrt(var + EPS)
    if act:
        y = jnp.where(y >= 0, y, 0.01 * y)
    o_ref[...] = y


def _in_add_act_kernel(x_ref, r_ref, o_ref):
    x = x_ref[...].astype(jnp.float32)
    mean = jnp.mean(x, axis=-1, keepdims=True)
    var = jnp.mean(jnp.square(x - mean), axis=-1, keepdims=True)
    y = (x - mean) * jax.lax.rsqrt(var + EPS) + r_ref[...].astype(jnp.float32)
    o_ref[...] = jnp.where(y >= 0, y, 0.01 * y)


def _to_rows(x):
    Bn, D, H, W, C = x.shape
    S = D * H * W
    return x.reshape(Bn, S, C).transpose(0, 2, 1).reshape(Bn * C, S)


def _from_rows(y, shape):
    Bn, D, H, W, C = shape
    S = D * H * W
    return y.reshape(Bn, C, S).transpose(0, 2, 1).reshape(Bn, D, H, W, C)


def instance_norm(x, act=False):
    """InstanceNorm3d (no affine, eps=1e-5); optional fused LeakyReLU(0.01)."""
    shape = x.shape
    xr = _to_rows(x.astype(jnp.bfloat16))
    y = pl.pallas_call(
        functools.partial(_in_kernel, act=act),
        out_shape=jax.ShapeDtypeStruct(xr.shape, jnp.float32),
    )(xr)
    return _from_rows(y, shape)


def instance_norm_add_act(x, res):
    """LeakyReLU(InstanceNorm(x) + res) fused in one kernel."""
    shape = x.shape
    xr = _to_rows(x.astype(jnp.bfloat16))
    rr = _to_rows(res.astype(jnp.bfloat16))
    y = pl.pallas_call(
        _in_add_act_kernel,
        out_shape=jax.ShapeDtypeStruct(xr.shape, jnp.float32),
    )(xr, rr)
    return _from_rows(y, shape)


# ----------------------------- window attention (per-window, all heads) -----
def _attn_kernel(q_ref, k_ref, v_ref, bias_ref, o_ref, *, scale):
    q = q_ref[0]                                           # (H, N, Dh) bf16
    k = k_ref[0]
    v = v_ref[0]
    s = jnp.einsum("hnd,hmd->hnm", q, k,
                   preferred_element_type=jnp.float32) * scale + bias_ref[...]
    s = s - jnp.max(s, axis=-1, keepdims=True)
    e = jnp.exp(s)
    p = e * pl.reciprocal(jnp.sum(e, axis=-1, keepdims=True), approx=True)
    o = jnp.einsum("hnm,hmd->hnd", p.astype(v.dtype), v,
                   preferred_element_type=jnp.float32)
    o_ref[...] = o[None]


def attention_core(q, k, v, bias, scale):
    """q,k,v: (BW, H, N, Dh); bias: (H, N, N) resident across the grid."""
    BW, H, N, Dh = q.shape
    return pl.pallas_call(
        functools.partial(_attn_kernel, scale=scale),
        grid=(BW,),
        in_specs=[pl.BlockSpec((1, H, N, Dh), lambda i: (i, 0, 0, 0)),
                  pl.BlockSpec((1, H, N, Dh), lambda i: (i, 0, 0, 0)),
                  pl.BlockSpec((1, H, N, Dh), lambda i: (i, 0, 0, 0)),
                  pl.BlockSpec((H, N, N), lambda i: (0, 0, 0))],
        out_specs=pl.BlockSpec((1, H, N, Dh), lambda i: (i, 0, 0, 0)),
        out_shape=jax.ShapeDtypeStruct((BW, H, N, Dh), jnp.float32),
        compiler_params=pltpu.CompilerParams(
            dimension_semantics=("parallel",),
            vmem_limit_bytes=48 * 1024 * 1024),
    )(q.astype(jnp.bfloat16), k.astype(jnp.bfloat16),
      v.astype(jnp.bfloat16), bias.astype(jnp.float32))


# ----------------------------- 3x3x3 conv (tap-loop kernel, no im2col) ------
def _conv3d_kernel(x_ref, w_ref, o_ref, *, offsets):
    tm = o_ref.shape[0]
    xb = x_ref[0]                                          # (rb, Ca) bf16
    acc = jnp.zeros(o_ref.shape, jnp.float32)
    for t, off in enumerate(offsets):
        a = xb[off:off + tm, :]                            # static shifted slice
        acc = acc + jnp.dot(a, w_ref[t], preferred_element_type=jnp.float32)
    o_ref[...] = acc


def conv3x3x3(x, w):
    """3x3x3 conv, stride 1, pad 1, no bias.  x channels-last, w (27,Cin,Cout)
    with tap order (kd, kh, kw).  The kw taps are folded into channels so the
    kernel only loops over 9 (kd, kh) row-shift taps."""
    Bn, D, H, W, C = x.shape
    Cout = w.shape[-1]
    xw = jnp.pad(x, ((0, 0), (0, 0), (0, 0), (1, 1), (0, 0)))
    xa = jnp.concatenate([xw[:, :, :, 0:W, :], xw[:, :, :, 1:W + 1, :],
                          xw[:, :, :, 2:W + 2, :]], axis=-1)     # (B,D,H,W,3C)
    xa = jnp.pad(xa, ((0, 0), (1, 1), (1, 1), (0, 0), (0, 0)))   # pad D, H
    Ca = 3 * C
    P = Bn * (D + 2) * (H + 2) * W
    plane, rowl = (H + 2) * W, W
    offsets = tuple(kd * plane + kh * rowl for kd in range(3) for kh in range(3))
    max_off = offsets[-1]
    tm = _round_up(max(max_off, min(P, 512)), 8)
    ntiles = -(-P // tm)
    rb = _round_up(tm + max_off, 8)

    w9 = w.reshape(3, 3, 3, C, Cout).reshape(9, Ca, Cout)
    xf = xa.reshape(P, Ca)
    if Ca < 8:                                   # keep MXU contraction >= 8
        xf = jnp.pad(xf, ((0, 0), (0, 8 - Ca)))
        w9 = jnp.pad(w9, ((0, 0), (0, 8 - Ca), (0, 0)))
        Ca = 8
    xf = xf.astype(jnp.bfloat16)
    total = (ntiles - 1) * tm + rb
    xf = jnp.pad(xf, ((0, total - P), (0, 0)))
    # per-tile halo slabs (row overlap = max_off) so the kernel needs only
    # static slices of its own block
    xov = jnp.stack([xf[i * tm:i * tm + rb] for i in range(ntiles)], axis=0)

    out = pl.pallas_call(
        functools.partial(_conv3d_kernel, offsets=offsets),
        grid=(ntiles,),
        in_specs=[pl.BlockSpec((1, rb, Ca), lambda i: (i, 0, 0)),
                  pl.BlockSpec((9, Ca, Cout), lambda i: (0, 0, 0))],
        out_specs=pl.BlockSpec((tm, Cout), lambda i: (i, 0)),
        out_shape=jax.ShapeDtypeStruct((ntiles * tm, Cout), jnp.float32),
        compiler_params=pltpu.CompilerParams(dimension_semantics=("parallel",)),
    )(xov, w9.astype(jnp.bfloat16))
    out = out[:P].reshape(Bn, D + 2, H + 2, W, Cout)[:, :D, :H, :, :]
    return out


def conv1x1x1(x, w, bias=None):
    Bn, D, H, W, C = x.shape
    out = matmul(x.reshape(-1, C), w, bias)
    return out.reshape(Bn, D, H, W, -1)


def patch_embed(x, w, bias):
    """Conv3d kernel=2, stride=2 with bias.  w: (8*Cin, Cout)."""
    Bn, D, H, W, C = x.shape
    x = x.reshape(Bn, D // 2, 2, H // 2, 2, W // 2, 2, C)
    x = x.transpose(0, 1, 3, 5, 2, 4, 6, 7).reshape(Bn, D // 2, H // 2, W // 2, 8 * C)
    out = matmul(x.reshape(-1, 8 * C), w, bias)
    return out.reshape(Bn, D // 2, H // 2, W // 2, -1)


def transp_conv2x2x2(x, w):
    """ConvTranspose3d kernel=2, stride=2, no bias.  w: (Cin, 8*Cout)."""
    Bn, D, H, W, C = x.shape
    Cout = w.shape[1] // 8
    y = matmul(x.reshape(-1, C), w)
    y = y.reshape(Bn, D, H, W, 2, 2, 2, Cout)
    y = y.transpose(0, 1, 4, 2, 5, 3, 6, 7).reshape(Bn, 2 * D, 2 * H, 2 * W, Cout)
    return y


# ----------------------------- Swin transformer pieces -----------------------
def compute_rel_pos_index(ws):
    coords = np.stack(np.meshgrid(np.arange(ws[0]), np.arange(ws[1]),
                                  np.arange(ws[2]), indexing="ij"))
    cf = coords.reshape(3, -1)
    rel = (cf[:, :, None] - cf[:, None, :]).transpose(1, 2, 0).astype(np.int64)
    rel[:, :, 0] += ws[0] - 1
    rel[:, :, 1] += ws[1] - 1
    rel[:, :, 2] += ws[2] - 1
    rel[:, :, 0] *= (2 * ws[1] - 1) * (2 * ws[2] - 1)
    rel[:, :, 1] *= (2 * ws[2] - 1)
    return rel.sum(-1)        # (343, 343)


REL_POS_INDEX = compute_rel_pos_index(WINDOW)


def window_partition(x, ws):
    Bn, D, H, W, C = x.shape
    x = x.reshape(Bn, D // ws[0], ws[0], H // ws[1], ws[1], W // ws[2], ws[2], C)
    return x.transpose(0, 1, 3, 5, 2, 4, 6, 7).reshape(-1, ws[0] * ws[1] * ws[2], C)


def window_reverse(win, ws, Bn, D, H, W):
    x = win.reshape(Bn, D // ws[0], H // ws[1], W // ws[2], ws[0], ws[1], ws[2], -1)
    return x.transpose(0, 1, 4, 2, 5, 3, 6, 7).reshape(Bn, D, H, W, -1)


def window_attention(xw, p, num_heads):
    BW, N, C = xw.shape
    hd = C // num_heads
    qkv = matmul(xw.reshape(-1, C), p["qkv_w"], p["qkv_b"])
    qkv = qkv.reshape(BW, N, 3, num_heads, hd).transpose(2, 0, 3, 1, 4)
    q, k, v = qkv[0], qkv[1], qkv[2]
    o = attention_core(q, k, v, p["attn_bias"], float(hd) ** -0.5)
    o = o.transpose(0, 2, 1, 3).reshape(BW, N, C)
    return matmul(o.reshape(-1, C), p["proj_w"], p["proj_b"]).reshape(BW, N, C)


def swin_block(x, p, num_heads):
    # TODO(synk): shifted-window (torch.roll + attention-mask) path not implemented;
    # with depths=(1,1,1,1) every block has shift_size == 0, matching the PyTorch model.
    Bn, D, H, W, C = x.shape
    ws = [min(w, s) for w, s in zip(WINDOW, (D, H, W))]     # get_window_size (shift=0)
    shortcut = x
    xn = layer_norm(x.reshape(-1, C), p["norm1_g"], p["norm1_b"]).reshape(Bn, D, H, W, C)
    pd, ph, pw = (-D) % ws[0], (-H) % ws[1], (-W) % ws[2]
    xp = jnp.pad(xn, ((0, 0), (0, pd), (0, ph), (0, pw), (0, 0)))
    Dp, Hp, Wp = D + pd, H + ph, W + pw
    xw = window_partition(xp, ws)
    aw = window_attention(xw, p, num_heads)
    xr = window_reverse(aw, ws, Bn, Dp, Hp, Wp)[:, :D, :H, :W, :]
    x = shortcut + xr
    x_flat = x.reshape(-1, C)
    # MLP: LayerNorm fused into fc1 (+GELU), residual fused into fc2 epilogue.
    h = ln_matmul(x_flat, p["norm2_g"], p["norm2_b"], p["fc1_w"], p["fc1_b"], act="gelu")
    h = matmul(h, p["fc2_w"], p["fc2_b"], residual=x_flat)
    return h.reshape(Bn, D, H, W, C)


def patch_merging(x, p):
    # original MONAI "merging" (v1) concatenation order (including its duplicated slices)
    Bn, D, H, W, C = x.shape
    x0 = x[:, 0::2, 0::2, 0::2, :]
    x1 = x[:, 1::2, 0::2, 0::2, :]
    x2 = x[:, 0::2, 1::2, 0::2, :]
    x3 = x[:, 0::2, 0::2, 1::2, :]
    x4 = x[:, 1::2, 0::2, 1::2, :]
    x5 = x[:, 0::2, 1::2, 0::2, :]
    x6 = x[:, 0::2, 0::2, 1::2, :]
    x7 = x[:, 1::2, 1::2, 1::2, :]
    xc = jnp.concatenate([x0, x1, x2, x3, x4, x5, x6, x7], axis=-1)
    xf = ln_matmul(xc.reshape(-1, 8 * C), p["norm_g"], p["norm_b"], p["red_w"])
    return xf.reshape(Bn, D // 2, H // 2, W // 2, 2 * C)


def proj_out(x):
    Bn, D, H, W, C = x.shape
    g = jnp.ones((C,), jnp.float32)
    b = jnp.zeros((C,), jnp.float32)
    return layer_norm(x.reshape(-1, C), g, b).reshape(x.shape)


def basic_layer(x, p, num_heads):
    for bp in p["blocks"]:
        x = swin_block(x, bp, num_heads)
    return patch_merging(x, p["merge"])


# ----------------------------- UNETR encoder / decoder blocks ----------------
def unet_res_block(x, p):
    out = instance_norm(conv3x3x3(x, p["w1"]), act=True)    # conv -> IN -> LReLU (fused)
    out = conv3x3x3(out, p["w2"])
    res = x
    if p["down"]:
        res = instance_norm(conv1x1x1(x, p["w3"]))
    return instance_norm_add_act(out, res)                  # IN -> +res -> LReLU (fused)


def unetr_up_block(x, skip, p):
    y = transp_conv2x2x2(x, p["up_w"])
    y = jnp.concatenate([y, skip], axis=-1)                  # torch.cat((out, skip), dim=1)
    return unet_res_block(y, p["res"])


# ----------------------------- full forward ----------------------------------
def swin_unetr_forward(params, x_nc):
    x = jnp.transpose(x_nc, (0, 2, 3, 4, 1))                 # NCDHW -> channels-last
    # Swin ViT
    x0 = patch_embed(x, params["patch_w"], params["patch_b"])
    h0 = proj_out(x0)
    x1 = basic_layer(x0, params["layers"][0], NUM_HEADS[0])
    h1 = proj_out(x1)
    x2 = basic_layer(x1, params["layers"][1], NUM_HEADS[1])
    h2 = proj_out(x2)
    x3 = basic_layer(x2, params["layers"][2], NUM_HEADS[2])
    h3 = proj_out(x3)
    x4 = basic_layer(x3, params["layers"][3], NUM_HEADS[3])
    h4 = proj_out(x4)
    # UNETR encoders
    enc0 = unet_res_block(x, params["enc1"])
    enc1 = unet_res_block(h0, params["enc2"])
    enc2 = unet_res_block(h1, params["enc3"])
    enc3 = unet_res_block(h2, params["enc4"])
    dec4 = unet_res_block(h4, params["enc10"])
    # decoders
    dec3 = unetr_up_block(dec4, h3, params["dec5"])
    dec2 = unetr_up_block(dec3, enc3, params["dec4"])
    dec1 = unetr_up_block(dec2, enc2, params["dec3"])
    dec0 = unetr_up_block(dec1, enc1, params["dec2"])
    out = unetr_up_block(dec0, enc0, params["dec1"])
    logits = conv1x1x1(out, params["out_w"], params["out_b"])
    return jnp.transpose(logits, (0, 4, 1, 2, 3))            # back to NCDHW


# ----------------------------- deterministic parameter init ------------------
class ParamFactory:
    def __init__(self, key):
        self._key = key
        self._n = 0

    def __call__(self, shape, scale=0.02, offset=0.0):
        self._n += 1
        k = jax.random.fold_in(self._key, self._n)
        return offset + scale * jax.random.normal(k, shape, dtype=jnp.float32)


def init_params(key):
    pf = ParamFactory(key)
    fs = FEATURE_SIZE
    stage_res = [tuple(s // (2 ** (i + 1)) for s in IMG) for i in range(4)]
    stage_ws = [tuple(min(w, s) for w, s in zip(WINDOW, r)) for r in stage_res]
    ntab = (2 * WINDOW[0] - 1) * (2 * WINDOW[1] - 1) * (2 * WINDOW[2] - 1)

    def norm_pair(c):
        return pf((c,), 0.02, 1.0), pf((c,), 0.02)

    def swin_block_params(dim, nh, n_tok):
        n1g, n1b = norm_pair(dim)
        n2g, n2b = norm_pair(dim)
        hidden = int(MLP_RATIO * dim)
        rpb = pf((ntab, nh))
        # precompute the (H, N, N) relative-position bias once (no per-step gather)
        idx = jnp.asarray(REL_POS_INDEX[:n_tok, :n_tok].reshape(-1))
        attn_bias = rpb[idx].reshape(n_tok, n_tok, nh).transpose(2, 0, 1)
        return dict(norm1_g=n1g, norm1_b=n1b,
                    qkv_w=pf((dim, 3 * dim)), qkv_b=pf((3 * dim,)),
                    attn_bias=attn_bias,
                    proj_w=pf((dim, dim)), proj_b=pf((dim,)),
                    norm2_g=n2g, norm2_b=n2b,
                    fc1_w=pf((dim, hidden)), fc1_b=pf((hidden,)),
                    fc2_w=pf((hidden, dim)), fc2_b=pf((dim,)))

    def merge_params(dim):
        ng, nb = norm_pair(8 * dim)
        return dict(norm_g=ng, norm_b=nb, red_w=pf((8 * dim, 2 * dim)))

    def res_block_params(cin, cout):
        d = dict(w1=pf((27, cin, cout)), w2=pf((27, cout, cout)), down=(cin != cout))
        if d["down"]:
            d["w3"] = pf((cin, cout))
        return d

    def up_block_params(cin, cout):
        return dict(up_w=pf((cin, 8 * cout)), res=res_block_params(2 * cout, cout))

    layers = []
    for i in range(4):
        dim = fs * (2 ** i)
        n_tok = int(np.prod(stage_ws[i]))
        layers.append(dict(
            blocks=[swin_block_params(dim, NUM_HEADS[i], n_tok) for _ in range(DEPTHS[i])],
            merge=merge_params(dim)))

    return dict(
        patch_w=pf((8 * IN_CH, fs)), patch_b=pf((fs,)),
        layers=layers,
        enc1=res_block_params(IN_CH, fs),
        enc2=res_block_params(fs, fs),
        enc3=res_block_params(2 * fs, 2 * fs),
        enc4=res_block_params(4 * fs, 4 * fs),
        enc10=res_block_params(16 * fs, 16 * fs),
        dec5=up_block_params(16 * fs, 8 * fs),
        dec4=up_block_params(8 * fs, 4 * fs),
        dec3=up_block_params(4 * fs, 2 * fs),
        dec2=up_block_params(2 * fs, fs),
        dec1=up_block_params(fs, fs),
        out_w=pf((fs, OUT_CH)), out_b=pf((OUT_CH,)),
    )


# ----------------------------- main -----------------------------
if __name__ == "__main__":
    key = jax.random.PRNGKey(0)
    x_key, p_key = jax.random.split(key)
    # PyTorch-style NCDHW input
    x_in = jax.random.normal(x_key, (B, IN_CH) + IMG, dtype=jnp.float32)
    params = init_params(p_key)

    logits = swin_unetr_forward(params, x_in)
    logits = jax.block_until_ready(logits)

    assert logits.shape == (B, OUT_CH) + IMG, logits.shape
    assert bool(jnp.isfinite(logits).all())
    print("KERNEL_OK")
</pallas_src>

<mosaic_0001>
module attributes {stable_mosaic.version = 11 : i64} {
  func.func @_mm_kernel(%arg0: i32, %arg1: memref<512x8xbf16, #tpu.memory_space<vmem>>, %arg2: memref<8x12xbf16, #tpu.memory_space<vmem>>, %arg3: memref<1x12xf32, #tpu.memory_space<vmem>>, %arg4: memref<512x12xf32, #tpu.memory_space<vmem>>) attributes {dimension_semantics = [#tpu.dimension_semantics<parallel>], iteration_bounds = array<i64: 8>, scalar_prefetch = 0 : i64, scratch_operands = 0 : i64, tpu.core_type = #tpu.core_type<tc>, window_params = [{transform_indices = @transform_0, window_bounds = array<i64: 512, 8>}, {pipeline_mode = #tpu.pipeline_mode<synchronous>, transform_indices = @transform_1, window_bounds = array<i64: 8, 12>}, {pipeline_mode = #tpu.pipeline_mode<synchronous>, transform_indices = @transform_2, window_bounds = array<i64: 1, 12>}, {transform_indices = @transform_3, window_bounds = array<i64: 512, 12>}]} {
    %c0 = arith.constant 0 : index
    %c0_0 = arith.constant 0 : index
    %0 = vector.load %arg1[%c0, %c0_0] : memref<512x8xbf16, #tpu.memory_space<vmem>>, vector<512x8xbf16>
    %c0_1 = arith.constant 0 : index
    %c0_2 = arith.constant 0 : index
    %1 = vector.load %arg2[%c0_1, %c0_2] : memref<8x12xbf16, #tpu.memory_space<vmem>>, vector<8x12xbf16>
    %cst = arith.constant dense<0.000000e+00> : vector<512x12xf32>
    %2 = tpu.matmul %0, %1, %cst {dimension_numbers = #tpu.dot_dimension_numbers<[1], [0], [0], [1], [0, 0, 1, 1], [], []>} : vector<512x8xbf16>, vector<8x12xbf16>, vector<512x12xf32> -> vector<512x12xf32>
    %c0_3 = arith.constant 0 : index
    %c0_4 = arith.constant 0 : index
    %3 = vector.load %arg3[%c0_3, %c0_4] : memref<1x12xf32, #tpu.memory_space<vmem>>, vector<1x12xf32>
    %4 = vector.broadcast %3 : vector<1x12xf32> to vector<512x12xf32>
    %5 = arith.addf %2, %4 : vector<512x12xf32>
    %c0_5 = arith.constant 0 : index
    %c0_6 = arith.constant 0 : index
    %6 = vector.load %arg4[%c0_5, %c0_6] : memref<512x12xf32, #tpu.memory_space<vmem>>, vector<512x12xf32>
    tpu.vector_store %arg4[%c0_5, %c0_6], %5 {strides = array<i32>} : memref<512x12xf32, #tpu.memory_space<vmem>>, vector<512x12xf32>,
    return
  }
  func.func @transform_0(%arg0: i32) -> (i32, i32) {
    %c0_i32 = arith.constant 0 : i32
    %c0_i32_0 = arith.constant 0 : i32
    return %arg0, %c0_i32 : i32, i32
  }
  func.func @transform_1(%arg0: i32) -> (i32, i32) {
    %c0_i32 = arith.constant 0 : i32
    %c0_i32_0 = arith.constant 0 : i32
    %c0_i32_1 = arith.constant 0 : i32
    return %c0_i32, %c0_i32_0 : i32, i32
  }
  func.func @transform_2(%arg0: i32) -> (i32, i32) {
    %c0_i32 = arith.constant 0 : i32
    %c0_i32_0 = arith.constant 0 : i32
    %c0_i32_1 = arith.constant 0 : i32
    return %c0_i32, %c0_i32_0 : i32, i32
  }
  func.func @transform_3(%arg0: i32) -> (i32, i32) {
    %c0_i32 = arith.constant 0 : i32
    %c0_i32_0 = arith.constant 0 : i32
    return %arg0, %c0_i32 : i32, i32
  }
}

</mosaic_0001>

<llo_original>
// kernel: tpu_custom_call.1
$region0: #{tpu_custom_call.1}
  #allocation0 [shape = 'u32[]', space=smem, size = 0x4, offset = 0x4, fixed_abs, tag = 'smem constant byte address 0x4 - core index']
  #allocation1 [shape = 'u32[144,128]{1,0:T(1,128)}', space=vmem, size = 0x12000, scoped, tag = 'internal scratch']
  %s0 = inlined_call_operand.vmem [shape: bf16[4096,8], index: 0, kind: input, shape index: {}]
  %s1 = inlined_call_operand.hbm [shape: bf16[8,12], index: 1, kind: input, shape index: {}]
  %s2 = inlined_call_operand.hbm [shape: f32[1,12], index: 2, kind: input, shape index: {}]
  %s3 = inlined_call_operand.vmem [shape: f32[4096,12], index: 3, kind: output, shape index: {}]
  %s4 = sld [smem:[#allocation0]]
  $region53: #{tpu_custom_call.1} parent=0
    _
  %s6 = ssub.s32 1, %s4
  %s7 = scalar_select 0, %s6, %s4
  $region1: #{tpu_custom_call.1} parent=0
    #allocation2 [shape = 'u8[2048]{0}', space=vmem, size = 0x800, scoped, tag = 'input window, operand 1, single buffered']
    #allocation3 [shape = 's32[2]{0}', space=sflag, size = 0x8, scoped, tag = 'scoped memory for tpu_custom_call.1']
    #allocation4 [shape = 'u8[512]{0}', space=vmem, size = 0x400, scoped, tag = 'input window, operand 2, single buffered']
    #allocation5 [shape = 's32[1]{0}', space=sflag, size = 0x4, scoped, tag = 'scoped memory for tpu_custom_call.1']
    %8 = vsyncpa [#allocation3], 0
    %9 = vsyncpa [#allocation5], 0
    loop: start=0, step=1, limit=10
    $region2: #{tpu_custom_call.1} parent=1 // loop_pre_header
      _
    $region3: #{tpu_custom_call.1} parent=1 // loop_header
      %s11 = sphi 0, %s15
      %p12 = scmp.ge.s32.totalorder %s11, 10
      %s21 = sphi 0, %s23
      %s24 = sphi 0, %s21
      %s25 = sphi 0, %s24
      %s41 = sphi 0, %s25
      %s45 = sphi 0, %s45
      %s47 = sphi 0, %s45
      %s48 = sphi 0, %s47
      %s62 = sphi 0, %s48
      %s66 = sphi 0, %s66
      %s68 = sphi 0, %s66
      %s69 = sphi 0, %s68
      %s83 = sphi 0, %s69
      %s89 = sphi 0, %s91
      %s92 = sphi 0, %s89
      %s93 = sphi 0, %s92
      %s109 = sphi 0, %s93
    $region4: #{tpu_custom_call.1} parent=1 // loop_header_branch
      %14 = sbr.rel (%p12) target = $region8
    $region5: #{tpu_custom_call.1} parent=1 // loop_body
      %s16 = ssub.s32 %s11, 1
      %s17 = ssub.s32 %s11, 2
      %s18 = sadd.s32 %s11, 1
      %s19 = ssub.s32 %s11, %s18
      %p20 = scmp.eq.s32.totalorder %s19, 0
      %s22 = sadd.s32 %s21, 1
      %s23 = scalar_select %p20, %s21, %s22
      %p26 = pneg %p20
      %p27 = scmp.eq.s32.totalorder %s11, 7
      %p28 = por %p26, %p27
      %p29 = scmp.ne.s32.totalorder %s21, %s24
      %p30 = scmp.eq.s32.totalorder %s11, 0
      %p31 = por %p29, %p30
      %p32 = scmp.ne.s32.totalorder %s21, %s24
      %p33 = scmp.eq.s32.totalorder %s16, 7
      %p34 = por %p32, %p33
      %p35 = scmp.ne.s32.totalorder %s24, %s25
      %p36 = scmp.eq.s32.totalorder %s16, 0
      %p37 = por %p35, %p36
      %p38 = scmp.ne.s32.totalorder %s24, %s25
      %p39 = scmp.eq.s32.totalorder %s17, 7
      %p40 = por %p38, %p39
      %p42 = scmp.ne.s32.totalorder %s25, %s41
      %p43 = scmp.eq.s32.totalorder %s17, 0
      %p44 = por %p42, %p43
      %s46 = sadd.s32 %s45, 1
      %p49 = scmp.eq.s32.totalorder %s11, 7
      %p50 = scmp.ne.s32.totalorder %s45, %s47
      %p51 = scmp.eq.s32.totalorder %s11, 0
      %p52 = por %p50, %p51
      %p53 = scmp.ne.s32.totalorder %s45, %s47
      %p54 = scmp.eq.s32.totalorder %s16, 7
      %p55 = por %p53, %p54
      %p56 = scmp.ne.s32.totalorder %s47, %s48
      %p57 = scmp.eq.s32.totalorder %s16, 0
      %p58 = por %p56, %p57
      %p59 = scmp.ne.s32.totalorder %s47, %s48
      %p60 = scmp.eq.s32.totalorder %s17, 7
      %p61 = por %p59, %p60
      %p63 = scmp.ne.s32.totalorder %s48, %s62
      %p64 = scmp.eq.s32.totalorder %s17, 0
      %p65 = por %p63, %p64
      %s67 = sadd.s32 %s66, 1
      %p70 = scmp.eq.s32.totalorder %s11, 7
      %p71 = scmp.ne.s32.totalorder %s66, %s68
      %p72 = scmp.eq.s32.totalorder %s11, 0
      %p73 = por %p71, %p72
      %p74 = scmp.ne.s32.totalorder %s66, %s68
      %p75 = scmp.eq.s32.totalorder %s16, 7
      %p76 = por %p74, %p75
      %p77 = scmp.ne.s32.totalorder %s68, %s69
      %p78 = scmp.eq.s32.totalorder %s16, 0
      %p79 = por %p77, %p78
      %p80 = scmp.ne.s32.totalorder %s68, %s69
      %p81 = scmp.eq.s32.totalorder %s17, 7
      %p82 = por %p80, %p81
      %p84 = scmp.ne.s32.totalorder %s69, %s83
      %p85 = scmp.eq.s32.totalorder %s17, 0
      %p86 = por %p84, %p85
      %s87 = ssub.s32 %s11, %s18
      %p88 = scmp.eq.s32.totalorder %s87, 0
      %s90 = sadd.s32 %s89, 1
      %s91 = scalar_select %p88, %s89, %s90
      %p94 = pneg %p88
      %p95 = scmp.eq.s32.totalorder %s11, 7
      %p96 = por %p94, %p95
      %p97 = scmp.ne.s32.totalorder %s89, %s92
      %p98 = scmp.eq.s32.totalorder %s11, 0
      %p99 = por %p97, %p98
      %p100 = scmp.ne.s32.totalorder %s89, %s92
      %p101 = scmp.eq.s32.totalorder %s16, 7
      %p102 = por %p100, %p101
      %p103 = scmp.ne.s32.totalorder %s92, %s93
      %p104 = scmp.eq.s32.totalorder %s16, 0
      %p105 = por %p103, %p104
      %p106 = scmp.ne.s32.totalorder %s92, %s93
      %p107 = scmp.eq.s32.totalorder %s17, 7
      %p108 = por %p106, %p107
      %p110 = scmp.ne.s32.totalorder %s93, %s109
      %p111 = scmp.eq.s32.totalorder %s17, 0
      %p112 = por %p110, %p111
      %p113 = scmp.le.s32.totalorder 1, %s11
      %p114 = scmp.lt.s32.totalorder %s11, 9
      %p115 = pnand %p113, %p114
      %p116 = pneg %p115
      // Predicated region
      $region9: #{tpu_custom_call.1} parent=5 // pred_check
        _
      $region10: #{tpu_custom_call.1} parent=5 // pred_check_branch
        %118 = sbr.rel (%p115) target = $region12
      $region11: #{tpu_custom_call.1} parent=5 // pred_region
        %s119 = ssub.s32 %s11, 1
        // Predicated region
        $region13: #{tpu_custom_call.1} parent=11 // pred_check
          %p120 = pneg %p58
        $region14: #{tpu_custom_call.1} parent=11 // pred_check_branch
          %122 = sbr.rel (%p120) target = $region16
        $region15: #{tpu_custom_call.1} parent=11 // pred_region
          %s124 = ssub.s32 64, 64
          %125 = vsyncadd [#allocation3], %s124
          %s127 = sshll.u32 [#allocation2], 4
          %s128 = int_to_ptr.vmem [resolvable:$true] %s127
          %130 = dma.hbm_to_vmem [thread:$0]  %s1, 64, %s128, [#allocation3]
        $region16: #{tpu_custom_call.1} parent=11 // pred_fallthru
          _
        // Predicated region
        $region17: #{tpu_custom_call.1} parent=11 // pred_check
          %p131 = pneg %p79
        $region18: #{tpu_custom_call.1} parent=11 // pred_check_branch
          %133 = sbr.rel (%p131) target = $region20
        $region19: #{tpu_custom_call.1} parent=11 // pred_region
          %s135 = ssub.s32 16, 16
          %136 = vsyncadd [#allocation5], %s135
          %s138 = sshll.u32 [#allocation4], 4
          %s139 = int_to_ptr.vmem [resolvable:$true] %s138
          %141 = dma.hbm_to_vmem [thread:$0]  %s2, 16, %s139, [#allocation5]
        $region20: #{tpu_custom_call.1} parent=11 // pred_fallthru
          _
      $region12: #{tpu_custom_call.1} parent=5 // pred_fallthru
        _
      %p142 = scmp.lt.s32.totalorder %s11, 8
      // Predicated region
      $region21: #{tpu_custom_call.1} parent=5 // pred_check
        %p143 = pneg %p142
      $region22: #{tpu_custom_call.1} parent=5 // pred_check_branch
        %145 = sbr.rel (%p143) target = $region24
      $region23: #{tpu_custom_call.1} parent=5 // pred_region
        // Predicated region
        $region25: #{tpu_custom_call.1} parent=23 // pred_check
          %p146 = pneg %p31
        $region26: #{tpu_custom_call.1} parent=23 // pred_check_branch
          %148 = sbr.rel (%p146) target = $region28
        $region27: #{tpu_custom_call.1} parent=23 // pred_region
          %s149 = smul.u32 64, %s11
          %p150 = scmp.lt.s32.totalorder %s149, 511
          %s151 = scalar_select %p150, %s149, 511
          %s152 = smul.addr %s151, 4
          %s153 = scalar_lea.vmem %s0, %s152
          %s154 = smul.u32 64, %s11
        $region28: #{tpu_custom_call.1} parent=23 // pred_fallthru
          _
      $region24: #{tpu_custom_call.1} parent=5 // pred_fallthru
        _
      %p155 = scmp.le.s32.totalorder 1, %s11
      %p156 = scmp.lt.s32.totalorder %s11, 9
      %p157 = pnand %p155, %p156
      %p158 = pneg %p157
      // Predicated region
      $region29: #{tpu_custom_call.1} parent=5 // pred_check
        _
      $region30: #{tpu_custom_call.1} parent=5 // pred_check_branch
        %160 = sbr.rel (%p157) target = $region32
      $region31: #{tpu_custom_call.1} parent=5 // pred_region
        %s161 = ssub.s32 %s11, 1
        // Predicated region
        $region33: #{tpu_custom_call.1} parent=31 // pred_check
          %p162 = pneg %p58
        $region34: #{tpu_custom_call.1} parent=31 // pred_check_branch
          %164 = sbr.rel (%p162) target = $region36
        $region35: #{tpu_custom_call.1} parent=31 // pred_region
          %165 = dma.done [#allocation3], 64
        $region36: #{tpu_custom_call.1} parent=31 // pred_fallthru
          _
        // Predicated region
        $region37: #{tpu_custom_call.1} parent=31 // pred_check
          %p166 = pneg %p79
        $region38: #{tpu_custom_call.1} parent=31 // pred_check_branch
          %168 = sbr.rel (%p166) target = $region40
        $region39: #{tpu_custom_call.1} parent=31 // pred_region
          %169 = dma.done [#allocation5], 16
        $region40: #{tpu_custom_call.1} parent=31 // pred_fallthru
          _
        %s170 = smul.u32 64, %s16
        %p171 = scmp.lt.s32.totalorder %s170, 511
        %s172 = scalar_select %p171, %s170, 511
        %s173 = smul.addr %s172, 4
        %s174 = scalar_lea.vmem %s0, %s173
        %p175 = pneg %p37
        %p176 = pneg %p34
        %p177 = pneg %p58
        %p178 = pneg %p55
        %p179 = pneg %p79
        %p180 = pneg %p76
        %p181 = pneg %p105
        %p182 = pneg %p102
        %s183 = smul.u32 64, %s16
        %p184 = scmp.lt.s32.totalorder %s183, 511
        %s185 = scalar_select %p184, %s183, 511
        %s186 = smul.addr %s185, 8
        %s187 = scalar_lea.vmem %s3, %s186
        %s188 = smul.u32 64, %s16
        %p189 = scmp.lt.s32.totalorder %s188, 511
        %s190 = scalar_select %p189, %s188, 511
        %s191 = smul.addr %s190, 4
        %s192 = scalar_lea.vmem %s0, %s191
        %s193 = smul.u32 64, %s16
        %s194 = smul.u32 64, %s16
        %p195 = scmp.lt.s32.totalorder %s194, 511
        %s196 = scalar_select %p195, %s194, 511
        %s197 = smul.addr %s196, 8
        %s198 = scalar_lea.vmem %s3, %s197
        %s199 = smul.u32 64, %s16
        %v201 = vld [vmem:[%s192] sm:$0xf]
        %v202 = vld [vmem:[%s192 + $0x4] sm:$0xf]
        %v203 = vld [vmem:[%s192 + $0x8] sm:$0xf]
        %v204 = vld [vmem:[%s192 + $0xc] sm:$0xf]
        %v205 = vld [vmem:[%s192 + $0x10] sm:$0xf]
        %v206 = vld [vmem:[%s192 + $0x14] sm:$0xf]
        %v207 = vld [vmem:[%s192 + $0x18] sm:$0xf]
        %v208 = vld [vmem:[%s192 + $0x1c] sm:$0xf]
        %v209 = vld [vmem:[%s192 + $0x20] sm:$0xf]
        %v210 = vld [vmem:[%s192 + $0x24] sm:$0xf]
        %v211 = vld [vmem:[%s192 + $0x28] sm:$0xf]
        %v212 = vld [vmem:[%s192 + $0x2c] sm:$0xf]
        %v213 = vld [vmem:[%s192 + $0x30] sm:$0xf]
        %v214 = vld [vmem:[%s192 + $0x34] sm:$0xf]
        %v215 = vld [vmem:[%s192 + $0x38] sm:$0xf]
        %v216 = vld [vmem:[%s192 + $0x3c] sm:$0xf]
        %v217 = vld [vmem:[%s192 + $0x40] sm:$0xf]
        %v218 = vld [vmem:[%s192 + $0x44] sm:$0xf]
        %v219 = vld [vmem:[%s192 + $0x48] sm:$0xf]
        %v220 = vld [vmem:[%s192 + $0x4c] sm:$0xf]
        %v221 = vld [vmem:[%s192 + $0x50] sm:$0xf]
        %v222 = vld [vmem:[%s192 + $0x54] sm:$0xf]
        %v223 = vld [vmem:[%s192 + $0x58] sm:$0xf]
        %v224 = vld [vmem:[%s192 + $0x5c] sm:$0xf]
        %v225 = vld [vmem:[%s192 + $0x60] sm:$0xf]
        %v226 = vld [vmem:[%s192 + $0x64] sm:$0xf]
        %v227 = vld [vmem:[%s192 + $0x68] sm:$0xf]
        %v228 = vld [vmem:[%s192 + $0x6c] sm:$0xf]
        %v229 = vld [vmem:[%s192 + $0x70] sm:$0xf]
        %v230 = vld [vmem:[%s192 + $0x74] sm:$0xf]
        %v231 = vld [vmem:[%s192 + $0x78] sm:$0xf]
        %v232 = vld [vmem:[%s192 + $0x7c] sm:$0xf]
        %v233 = vld [vmem:[%s192 + $0x80] sm:$0xf]
        %v234 = vld [vmem:[%s192 + $0x84] sm:$0xf]
        %v235 = vld [vmem:[%s192 + $0x88] sm:$0xf]
        %v236 = vld [vmem:[%s192 + $0x8c] sm:$0xf]
        %v237 = vld [vmem:[%s192 + $0x90] sm:$0xf]
        %v238 = vld [vmem:[%s192 + $0x94] sm:$0xf]
        %v239 = vld [vmem:[%s192 + $0x98] sm:$0xf]
        %v240 = vld [vmem:[%s192 + $0x9c] sm:$0xf]
        %v241 = vld [vmem:[%s192 + $0xa0] sm:$0xf]
        %v242 = vld [vmem:[%s192 + $0xa4] sm:$0xf]
        %v243 = vld [vmem:[%s192 + $0xa8] sm:$0xf]
        %v244 = vld [vmem:[%s192 + $0xac] sm:$0xf]
        %v245 = vld [vmem:[%s192 + $0xb0] sm:$0xf]
        %v246 = vld [vmem:[%s192 + $0xb4] sm:$0xf]
        %v247 = vld [vmem:[%s192 + $0xb8] sm:$0xf]
        %v248 = vld [vmem:[%s192 + $0xbc] sm:$0xf]
        %v249 = vld [vmem:[%s192 + $0xc0] sm:$0xf]
        %v250 = vld [vmem:[%s192 + $0xc4] sm:$0xf]
        %v251 = vld [vmem:[%s192 + $0xc8] sm:$0xf]
        %v252 = vld [vmem:[%s192 + $0xcc] sm:$0xf]
        %v253 = vld [vmem:[%s192 + $0xd0] sm:$0xf]
        %v254 = vld [vmem:[%s192 + $0xd4] sm:$0xf]
        %v255 = vld [vmem:[%s192 + $0xd8] sm:$0xf]
        %v256 = vld [vmem:[%s192 + $0xdc] sm:$0xf]
        %v257 = vld [vmem:[%s192 + $0xe0] sm:$0xf]
        %v258 = vld [vmem:[%s192 + $0xe4] sm:$0xf]
        %v259 = vld [vmem:[%s192 + $0xe8] sm:$0xf]
        %v260 = vld [vmem:[%s192 + $0xec] sm:$0xf]
        %v261 = vld [vmem:[%s192 + $0xf0] sm:$0xf]
        %v262 = vld [vmem:[%s192 + $0xf4] sm:$0xf]
        %v263 = vld [vmem:[%s192 + $0xf8] sm:$0xf]
        %v264 = vld [vmem:[%s192 + $0xfc] sm:$0xf]
        %v265 = vld [vmem:[#allocation2] sm:$0xf]
        %v266 = vld [vmem:[#allocation4] sm:$0x1]
        %v268 = vlaneseq
        %v269 = vshrl.u32 %v268, 7
        %v270 = vsub.s32 0, %v269
        %v271 = vrot.slane %v266, %v270
        %v337 = vunpack.c.l.b16 %v201
        %v338 = vunpack.c.l.b16 %v202
        %v339 = vunpack.c.l.b16 %v203
        %v340 = vunpack.c.l.b16 %v204
        %v341 = vunpack.c.l.b16 %v205
        %v342 = vunpack.c.l.b16 %v206
        %v343 = vunpack.c.l.b16 %v207
        %v344 = vunpack.c.l.b16 %v208
        %v345 = vunpack.c.l.b16 %v209
        %v346 = vunpack.c.l.b16 %v210
        %v347 = vunpack.c.l.b16 %v211
        %v348 = vunpack.c.l.b16 %v212
        %v349 = vunpack.c.l.b16 %v213
        %v350 = vunpack.c.l.b16 %v214
        %v351 = vunpack.c.l.b16 %v215
        %v352 = vunpack.c.l.b16 %v216
        %v353 = vunpack.c.l.b16 %v217
        %v354 = vunpack.c.l.b16 %v218
        %v355 = vunpack.c.l.b16 %v219
        %v356 = vunpack.c.l.b16 %v220
        %v357 = vunpack.c.l.b16 %v221
        %v358 = vunpack.c.l.b16 %v222
        %v359 = vunpack.c.l.b16 %v223
        %v360 = vunpack.c.l.b16 %v224
        %v361 = vunpack.c.l.b16 %v225
        %v362 = vunpack.c.l.b16 %v226
        %v363 = vunpack.c.l.b16 %v227
        %v364 = vunpack.c.l.b16 %v228
        %v365 = vunpack.c.l.b16 %v229
        %v366 = vunpack.c.l.b16 %v230
        %v367 = vunpack.c.l.b16 %v231
        %v368 = vunpack.c.l.b16 %v232
        %v369 = vunpack.c.l.b16 %v233
        %v370 = vunpack.c.l.b16 %v234
        %v371 = vunpack.c.l.b16 %v235
        %v372 = vunpack.c.l.b16 %v236
        %v373 = vunpack.c.l.b16 %v237
        %v374 = vunpack.c.l.b16 %v238
        %v375 = vunpack.c.l.b16 %v239
        %v376 = vunpack.c.l.b16 %v240
        %v377 = vunpack.c.l.b16 %v241
        %v378 = vunpack.c.l.b16 %v242
        %v379 = vunpack.c.l.b16 %v243
        %v380 = vunpack.c.l.b16 %v244
        %v381 = vunpack.c.l.b16 %v245
        %v382 = vunpack.c.l.b16 %v246
        %v383 = vunpack.c.l.b16 %v247
        %v384 = vunpack.c.l.b16 %v248
        %v385 = vunpack.c.l.b16 %v249
        %v386 = vunpack.c.l.b16 %v250
        %v387 = vunpack.c.l.b16 %v251
        %v388 = vunpack.c.l.b16 %v252
        %v389 = vunpack.c.l.b16 %v253
        %v390 = vunpack.c.l.b16 %v254
        %v391 = vunpack.c.l.b16 %v255
        %v392 = vunpack.c.l.b16 %v256
        %v393 = vunpack.c.l.b16 %v257
        %v394 = vunpack.c.l.b16 %v258
        %v395 = vunpack.c.l.b16 %v259
        %v396 = vunpack.c.l.b16 %v260
        %v397 = vunpack.c.l.b16 %v261
        %v398 = vunpack.c.l.b16 %v262
        %v399 = vunpack.c.l.b16 %v263
        %v400 = vunpack.c.l.b16 %v264
        %v401 = vpack.c.b16 %v338, %v337
        %v402 = vpack.c.b16 %v340, %v339
        %v403 = vpack.c.b16 %v342, %v341
        %v404 = vpack.c.b16 %v344, %v343
        %v405 = vpack.c.b16 %v346, %v345
        %v406 = vpack.c.b16 %v348, %v347
        %v407 = vpack.c.b16 %v350, %v349
        %v408 = vpack.c.b16 %v352, %v351
        %v409 = vpack.c.b16 %v354, %v353
        %v410 = vpack.c.b16 %v356, %v355
        %v411 = vpack.c.b16 %v358, %v357
        %v412 = vpack.c.b16 %v360, %v359
        %v413 = vpack.c.b16 %v362, %v361
        %v414 = vpack.c.b16 %v364, %v363
        %v415 = vpack.c.b16 %v366, %v365
        %v416 = vpack.c.b16 %v368, %v367
        %v417 = vpack.c.b16 %v370, %v369
        %v418 = vpack.c.b16 %v372, %v371
        %v419 = vpack.c.b16 %v374, %v373
        %v420 = vpack.c.b16 %v376, %v375
        %v421 = vpack.c.b16 %v378, %v377
        %v422 = vpack.c.b16 %v380, %v379
        %v423 = vpack.c.b16 %v382, %v381
        %v424 = vpack.c.b16 %v384, %v383
        %v425 = vpack.c.b16 %v386, %v385
        %v426 = vpack.c.b16 %v388, %v387
        %v427 = vpack.c.b16 %v390, %v389
        %v428 = vpack.c.b16 %v392, %v391
        %v429 = vpack.c.b16 %v394, %v393
        %v430 = vpack.c.b16 %v396, %v395
        %v431 = vpack.c.b16 %v398, %v397
        %v432 = vpack.c.b16 %v400, %v399
        %vm433 = vcmask 64512
        %v435 = vsel %vm433, %v401, 0
        %v438 = vsel %vm433, %v402, 0
        %v441 = vsel %vm433, %v403, 0
        %v444 = vsel %vm433, %v404, 0
        %v447 = vsel %vm433, %v405, 0
        %v450 = vsel %vm433, %v406, 0
        %v453 = vsel %vm433, %v407, 0
        %v456 = vsel %vm433, %v408, 0
        %v459 = vsel %vm433, %v409, 0
        %v462 = vsel %vm433, %v410, 0
        %v465 = vsel %vm433, %v411, 0
        %v468 = vsel %vm433, %v412, 0
        %v471 = vsel %vm433, %v413, 0
        %v474 = vsel %vm433, %v414, 0
        %v477 = vsel %vm433, %v415, 0
        %v480 = vsel %vm433, %v416, 0
        %v483 = vsel %vm433, %v417, 0
        %v486 = vsel %vm433, %v418, 0
        %v489 = vsel %vm433, %v419, 0
        %v492 = vsel %vm433, %v420, 0
        %v495 = vsel %vm433, %v421, 0
        %v498 = vsel %vm433, %v422, 0
        %v501 = vsel %vm433, %v423, 0
        %v504 = vsel %vm433, %v424, 0
        %v507 = vsel %vm433, %v425, 0
        %v510 = vsel %vm433, %v426, 0
        %v513 = vsel %vm433, %v427, 0
        %v516 = vsel %vm433, %v428, 0
        %v519 = vsel %vm433, %v429, 0
        %v522 = vsel %vm433, %v430, 0
        %v525 = vsel %vm433, %v431, 0
        %v528 = vsel %vm433, %v432, 0
        %vm530 = vcmask 1043456
        %v532 = vsel %vm530, %v265, 0
        %534 = vmatprep.subr.bf16.mxu0 0
        %535 = vmatpush1.bf16.msra.mxu0 %v532
        %536 = vmatprep.subr.bf16.mxu0 0
        %537 = vmatpush1.bf16.msra.mxu0 0
        %538 = vmatprep.subr.bf16.mxu0 0
        %539 = vmatpush1.bf16.msra.mxu0 0
        %540 = vmatprep.subr.bf16.mxu0 0
        %541 = vmatpush1.bf16.msra.mxu0 0
        %542 = vmatprep.subr.bf16.mxu0 0
        %543 = vmatpush1.bf16.msra.mxu0 0
        %544 = vmatprep.subr.bf16.mxu0 0
        %545 = vmatpush1.bf16.msra.mxu0 0
        %546 = vmatprep.subr.bf16.mxu0 0
        %547 = vmatpush1.bf16.msra.mxu0 0
        %548 = vmatprep.subr.bf16.mxu0 0
        %549 = vmatpush1.bf16.msra.mxu0 0
        %550 = vmatprep.subr.bf16.mxu0 0
        %551 = vmatpush1.bf16.msra.mxu0 0
        %552 = vmatprep.subr.bf16.mxu0 0
        %553 = vmatpush1.bf16.msra.mxu0 0
        %554 = vmatprep.subr.bf16.mxu0 0
        %555 = vmatpush1.bf16.msra.mxu0 0
        %556 = vmatprep.subr.bf16.mxu0 0
        %557 = vmatpush1.bf16.msra.mxu0 0
        %558 = vmatprep.subr.bf16.mxu0 0
        %559 = vmatpush1.bf16.msra.mxu0 0
        %560 = vmatprep.subr.bf16.mxu0 0
        %561 = vmatpush1.bf16.msra.mxu0 0
        %562 = vmatprep.subr.bf16.mxu0 0
        %563 = vmatpush1.bf16.msra.mxu0 0
        %564 = vmatprep.subr.bf16.mxu0 0
        %565 = vmatpush1.bf16.msra.mxu0 0
        %566 = vmatprep.mubr.bf16.mxu0 0
        %567 = vmatmul.mubr.bf16.gmra.mrb[0].mxu0 %v435
        %v568 = vpop.f32.mrb[0].mxu0
        %v569 = vadd.f32 %v271, %v568
        %v570 = vpop.f32.mrb[0].mxu0
        %v571 = vpop.f32.mrb[0].mxu0
        %v572 = vadd.f32 %v271, %v571
        %v573 = vpop.f32.mrb[0].mxu0
        %574 = vmatprep.mubr.bf16.mxu0 0
        %575 = vmatmul.mubr.bf16.gmra.mrb[0].mxu0 %v438
        %v576 = vpop.f32.mrb[0].mxu0
        %v577 = vadd.f32 %v271, %v576
        %v578 = vpop.f32.mrb[0].mxu0
        %v579 = vpop.f32.mrb[0].mxu0
        %v580 = vadd.f32 %v271, %v579
        %v581 = vpop.f32.mrb[0].mxu0
        %582 = vmatprep.mubr.bf16.mxu0 0
        %583 = vmatmul.mubr.bf16.gmra.mrb[0].mxu0 %v441
        %v584 = vpop.f32.mrb[0].mxu0
        %v585 = vadd.f32 %v271, %v584
        %v586 = vpop.f32.mrb[0].mxu0
        %v587 = vpop.f32.mrb[0].mxu0
        %v588 = vadd.f32 %v271, %v587
        %v589 = vpop.f32.mrb[0].mxu0
        %590 = vmatprep.mubr.bf16.mxu0 0
        %591 = vmatmul.mubr.bf16.gmra.mrb[0].mxu0 %v444
        %v592 = vpop.f32.mrb[0].mxu0
        %v593 = vadd.f32 %v271, %v592
        %v594 = vpop.f32.mrb[0].mxu0
        %v595 = vpop.f32.mrb[0].mxu0
        %v596 = vadd.f32 %v271, %v595
        %v597 = vpop.f32.mrb[0].mxu0
        %598 = vmatprep.mubr.bf16.mxu0 0
        %599 = vmatmul.mubr.bf16.gmra.mrb[0].mxu0 %v447
        %v600 = vpop.f32.mrb[0].mxu0
        %v601 = vadd.f32 %v271, %v600
        %v602 = vpop.f32.mrb[0].mxu0
        %v603 = vpop.f32.mrb[0].mxu0
        %v604 = vadd.f32 %v271, %v603
        %v605 = vpop.f32.mrb[0].mxu0
        %606 = vmatprep.mubr.bf16.mxu0 0
        %607 = vmatmul.mubr.bf16.gmra.mrb[0].mxu0 %v450
        %v608 = vpop.f32.mrb[0].mxu0
        %v609 = vadd.f32 %v271, %v608
        %v610 = vpop.f32.mrb[0].mxu0
        %v611 = vpop.f32.mrb[0].mxu0
        %v612 = vadd.f32 %v271, %v611
        %v613 = vpop.f32.mrb[0].mxu0
        %614 = vmatprep.mubr.bf16.mxu0 0
        %615 = vmatmul.mubr.bf16.gmra.mrb[0].mxu0 %v453
        %v616 = vpop.f32.mrb[0].mxu0
        %v617 = vadd.f32 %v271, %v616
        %v618 = vpop.f32.mrb[0].mxu0
        %v619 = vpop.f32.mrb[0].mxu0
        %v620 = vadd.f32 %v271, %v619
        %v621 = vpop.f32.mrb[0].mxu0
        %622 = vmatprep.mubr.bf16.mxu0 0
        %623 = vmatmul.mubr.bf16.gmra.mrb[0].mxu0 %v456
        %v624 = vpop.f32.mrb[0].mxu0
        %v625 = vadd.f32 %v271, %v624
        %v626 = vpop.f32.mrb[0].mxu0
        %v627 = vpop.f32.mrb[0].mxu0
        %v628 = vadd.f32 %v271, %v627
        %v629 = vpop.f32.mrb[0].mxu0
        %630 = vmatprep.mubr.bf16.mxu0 0
        %631 = vmatmul.mubr.bf16.gmra.mrb[0].mxu0 %v459
        %v632 = vpop.f32.mrb[0].mxu0
        %v633 = vadd.f32 %v271, %v632
        %v634 = vpop.f32.mrb[0].mxu0
        %v635 = vpop.f32.mrb[0].mxu0
        %v636 = vadd.f32 %v271, %v635
        %v637 = vpop.f32.mrb[0].mxu0
        %638 = vmatprep.mubr.bf16.mxu0 0
        %639 = vmatmul.mubr.bf16.gmra.mrb[0].mxu0 %v462
        %v640 = vpop.f32.mrb[0].mxu0
        %v641 = vadd.f32 %v271, %v640
        %v642 = vpop.f32.mrb[0].mxu0
        %v643 = vpop.f32.mrb[0].mxu0
        %v644 = vadd.f32 %v271, %v643
        %v645 = vpop.f32.mrb[0].mxu0
        %646 = vmatprep.mubr.bf16.mxu0 0
        %647 = vmatmul.mubr.bf16.gmra.mrb[0].mxu0 %v465
        %v648 = vpop.f32.mrb[0].mxu0
        %v649 = vadd.f32 %v271, %v648
        %v650 = vpop.f32.mrb[0].mxu0
        %v651 = vpop.f32.mrb[0].mxu0
        %v652 = vadd.f32 %v271, %v651
        %v653 = vpop.f32.mrb[0].mxu0
        %654 = vmatprep.mubr.bf16.mxu0 0
        %655 = vmatmul.mubr.bf16.gmra.mrb[0].mxu0 %v468
        %v656 = vpop.f32.mrb[0].mxu0
        %v657 = vadd.f32 %v271, %v656
        %v658 = vpop.f32.mrb[0].mxu0
        %v659 = vpop.f32.mrb[0].mxu0
        %v660 = vadd.f32 %v271, %v659
        %v661 = vpop.f32.mrb[0].mxu0
        %662 = vmatprep.mubr.bf16.mxu0 0
        %663 = vmatmul.mubr.bf16.gmra.mrb[0].mxu0 %v471
        %v664 = vpop.f32.mrb[0].mxu0
        %v665 = vadd.f32 %v271, %v664
        %v666 = vpop.f32.mrb[0].mxu0
        %v667 = vpop.f32.mrb[0].mxu0
        %v668 = vadd.f32 %v271, %v667
        %v669 = vpop.f32.mrb[0].mxu0
        %670 = vmatprep.mubr.bf16.mxu0 0
        %671 = vmatmul.mubr.bf16.gmra.mrb[0].mxu0 %v474
        %v672 = vpop.f32.mrb[0].mxu0
        %v673 = vadd.f32 %v271, %v672
        %v674 = vpop.f32.mrb[0].mxu0
        %v675 = vpop.f32.mrb[0].mxu0
        %v676 = vadd.f32 %v271, %v675
        %v677 = vpop.f32.mrb[0].mxu0
        %678 = vmatprep.mubr.bf16.mxu0 0
        %679 = vmatmul.mubr.bf16.gmra.mrb[0].mxu0 %v477
        %v680 = vpop.f32.mrb[0].mxu0
        %v681 = vadd.f32 %v271, %v680
        %v682 = vpop.f32.mrb[0].mxu0
        %v683 = vpop.f32.mrb[0].mxu0
        %v684 = vadd.f32 %v271, %v683
        %v685 = vpop.f32.mrb[0].mxu0
        %686 = vmatprep.mubr.bf16.mxu0 0
        %687 = vmatmul.mubr.bf16.gmra.mrb[0].mxu0 %v480
        %v688 = vpop.f32.mrb[0].mxu0
        %v689 = vadd.f32 %v271, %v688
        %v690 = vpop.f32.mrb[0].mxu0
        %v691 = vpop.f32.mrb[0].mxu0
        %v692 = vadd.f32 %v271, %v691
        %v693 = vpop.f32.mrb[0].mxu0
        %694 = vmatprep.mubr.bf16.mxu0 0
        %695 = vmatmul.mubr.bf16.gmra.mrb[0].mxu0 %v483
        %v696 = vpop.f32.mrb[0].mxu0
        %v697 = vadd.f32 %v271, %v696
        %v698 = vpop.f32.mrb[0].mxu0
        %v699 = vpop.f32.mrb[0].mxu0
        %v700 = vadd.f32 %v271, %v699
        %v701 = vpop.f32.mrb[0].mxu0
        %702 = vmatprep.mubr.bf16.mxu0 0
        %703 = vmatmul.mubr.bf16.gmra.mrb[0].mxu0 %v486
        %v704 = vpop.f32.mrb[0].mxu0
        %v705 = vadd.f32 %v271, %v704
        %v706 = vpop.f32.mrb[0].mxu0
        %v707 = vpop.f32.mrb[0].mxu0
        %v708 = vadd.f32 %v271, %v707
        %v709 = vpop.f32.mrb[0].mxu0
        %710 = vmatprep.mubr.bf16.mxu0 0
        %711 = vmatmul.mubr.bf16.gmra.mrb[0].mxu0 %v489
        %v712 = vpop.f32.mrb[0].mxu0
        %v713 = vadd.f32 %v271, %v712
        %v714 = vpop.f32.mrb[0].mxu0
        %v715 = vpop.f32.mrb[0].mxu0
        %v716 = vadd.f32 %v271, %v715
        %v717 = vpop.f32.mrb[0].mxu0
        %718 = vmatprep.mubr.bf16.mxu0 0
        %719 = vmatmul.mubr.bf16.gmra.mrb[0].mxu0 %v492
        %v720 = vpop.f32.mrb[0].mxu0
        %v721 = vadd.f32 %v271, %v720
        %v722 = vpop.f32.mrb[0].mxu0
        %v723 = vpop.f32.mrb[0].mxu0
        %v724 = vadd.f32 %v271, %v723
        %v725 = vpop.f32.mrb[0].mxu0
        %726 = vmatprep.mubr.bf16.mxu0 0
        %727 = vmatmul.mubr.bf16.gmra.mrb[0].mxu0 %v495
        %v728 = vpop.f32.mrb[0].mxu0
        %v729 = vadd.f32 %v271, %v728
        %v730 = vpop.f32.mrb[0].mxu0
        %v731 = vpop.f32.mrb[0].mxu0
        %v732 = vadd.f32 %v271, %v731
        %v733 = vpop.f32.mrb[0].mxu0
        %734 = vmatprep.mubr.bf16.mxu0 0
        %735 = vmatmul.mubr.bf16.gmra.mrb[0].mxu0 %v498
        %v736 = vpop.f32.mrb[0].mxu0
        %v737 = vadd.f32 %v271, %v736
        %v738 = vpop.f32.mrb[0].mxu0
        %v739 = vpop.f32.mrb[0].mxu0
        %v740 = vadd.f32 %v271, %v739
        %v741 = vpop.f32.mrb[0].mxu0
        %742 = vmatprep.mubr.bf16.mxu0 0
        %743 = vmatmul.mubr.bf16.gmra.mrb[0].mxu0 %v501
        %v744 = vpop.f32.mrb[0].mxu0
        %v745 = vadd.f32 %v271, %v744
        %v746 = vpop.f32.mrb[0].mxu0
        %v747 = vpop.f32.mrb[0].mxu0
        %v748 = vadd.f32 %v271, %v747
        %v749 = vpop.f32.mrb[0].mxu0
        %750 = vmatprep.mubr.bf16.mxu0 0
        %751 = vmatmul.mubr.bf16.gmra.mrb[0].mxu0 %v504
        %v752 = vpop.f32.mrb[0].mxu0
        %v753 = vadd.f32 %v271, %v752
        %v754 = vpop.f32.mrb[0].mxu0
        %v755 = vpop.f32.mrb[0].mxu0
        %v756 = vadd.f32 %v271, %v755
        %v757 = vpop.f32.mrb[0].mxu0
        %758 = vmatprep.mubr.bf16.mxu0 0
        %759 = vmatmul.mubr.bf16.gmra.mrb[0].mxu0 %v507
        %v760 = vpop.f32.mrb[0].mxu0
        %v761 = vadd.f32 %v271, %v760
        %v762 = vpop.f32.mrb[0].mxu0
        %v763 = vpop.f32.mrb[0].mxu0
        %v764 = vadd.f32 %v271, %v763
        %v765 = vpop.f32.mrb[0].mxu0
        %766 = vmatprep.mubr.bf16.mxu0 0
        %767 = vmatmul.mubr.bf16.gmra.mrb[0].mxu0 %v510
        %v768 = vpop.f32.mrb[0].mxu0
        %v769 = vadd.f32 %v271, %v768
        %v770 = vpop.f32.mrb[0].mxu0
        %v771 = vpop.f32.mrb[0].mxu0
        %v772 = vadd.f32 %v271, %v771
        %v773 = vpop.f32.mrb[0].mxu0
        %774 = vmatprep.mubr.bf16.mxu0 0
        %775 = vmatmul.mubr.bf16.gmra.mrb[0].mxu0 %v513
        %v776 = vpop.f32.mrb[0].mxu0
        %v777 = vadd.f32 %v271, %v776
        %v778 = vpop.f32.mrb[0].mxu0
        %v779 = vpop.f32.mrb[0].mxu0
        %v780 = vadd.f32 %v271, %v779
        %v781 = vpop.f32.mrb[0].mxu0
        %782 = vmatprep.mubr.bf16.mxu0 0
        %783 = vmatmul.mubr.bf16.gmra.mrb[0].mxu0 %v516
        %v784 = vpop.f32.mrb[0].mxu0
        %v785 = vadd.f32 %v271, %v784
        %v786 = vpop.f32.mrb[0].mxu0
        %v787 = vpop.f32.mrb[0].mxu0
        %v788 = vadd.f32 %v271, %v787
        %v789 = vpop.f32.mrb[0].mxu0
        %790 = vmatprep.mubr.bf16.mxu0 0
        %791 = vmatmul.mubr.bf16.gmra.mrb[0].mxu0 %v519
        %v792 = vpop.f32.mrb[0].mxu0
        %v793 = vadd.f32 %v271, %v792
        %v794 = vpop.f32.mrb[0].mxu0
        %v795 = vpop.f32.mrb[0].mxu0
        %v796 = vadd.f32 %v271, %v795
        %v797 = vpop.f32.mrb[0].mxu0
        %798 = vmatprep.mubr.bf16.mxu0 0
        %799 = vmatmul.mubr.bf16.gmra.mrb[0].mxu0 %v522
        %v800 = vpop.f32.mrb[0].mxu0
        %v801 = vadd.f32 %v271, %v800
        %v802 = vpop.f32.mrb[0].mxu0
        %v803 = vpop.f32.mrb[0].mxu0
        %v804 = vadd.f32 %v271, %v803
        %v805 = vpop.f32.mrb[0].mxu0
        %806 = vmatprep.mubr.bf16.mxu0 0
        %807 = vmatmul.mubr.bf16.gmra.mrb[0].mxu0 %v525
        %v808 = vpop.f32.mrb[0].mxu0
        %v809 = vadd.f32 %v271, %v808
        %v810 = vpop.f32.mrb[0].mxu0
        %v811 = vpop.f32.mrb[0].mxu0
        %v812 = vadd.f32 %v271, %v811
        %v813 = vpop.f32.mrb[0].mxu0
        %814 = vmatprep.mubr.bf16.mxu0 0
        %815 = vmatmul.mubr.bf16.gmra.mrb[0].mxu0 %v528
        %v816 = vpop.f32.mrb[0].mxu0
        %v817 = vadd.f32 %v271, %v816
        %v818 = vpop.f32.mrb[0].mxu0
        %v819 = vpop.f32.mrb[0].mxu0
        %v820 = vadd.f32 %v271, %v819
        %v821 = vpop.f32.mrb[0].mxu0
        %822 = vdwg.mxu0
        %vm823 = vcmask 97280
        %824 = vst.msk [vmem:[%s198] sm:$0xff] %vm823, %v569
        %825 = vst.msk [vmem:[%s198 + $0x8] sm:$0xff] %vm823, %v572
        %826 = vst.msk [vmem:[%s198 + $0x10] sm:$0xff] %vm823, %v577
        %827 = vst.msk [vmem:[%s198 + $0x18] sm:$0xff] %vm823, %v580
        %828 = vst.msk [vmem:[%s198 + $0x20] sm:$0xff] %vm823, %v585
        %829 = vst.msk [vmem:[%s198 + $0x28] sm:$0xff] %vm823, %v588
        %830 = vst.msk [vmem:[%s198 + $0x30] sm:$0xff] %vm823, %v593
        %831 = vst.msk [vmem:[%s198 + $0x38] sm:$0xff] %vm823, %v596
        %832 = vst.msk [vmem:[%s198 + $0x40] sm:$0xff] %vm823, %v601
        %833 = vst.msk [vmem:[%s198 + $0x48] sm:$0xff] %vm823, %v604
        %834 = vst.msk [vmem:[%s198 + $0x50] sm:$0xff] %vm823, %v609
        %835 = vst.msk [vmem:[%s198 + $0x58] sm:$0xff] %vm823, %v612
        %836 = vst.msk [vmem:[%s198 + $0x60] sm:$0xff] %vm823, %v617
        %837 = vst.msk [vmem:[%s198 + $0x68] sm:$0xff] %vm823, %v620
        %838 = vst.msk [vmem:[%s198 + $0x70] sm:$0xff] %vm823, %v625
        %839 = vst.msk [vmem:[%s198 + $0x78] sm:$0xff] %vm823, %v628
        %840 = vst.msk [vmem:[%s198 + $0x80] sm:$0xff] %vm823, %v633
        %841 = vst.msk [vmem:[%s198 + $0x88] sm:$0xff] %vm823, %v636
        %842 = vst.msk [vmem:[%s198 + $0x90] sm:$0xff] %vm823, %v641
        %843 = vst.msk [vmem:[%s198 + $0x98] sm:$0xff] %vm823, %v644
        %844 = vst.msk [vmem:[%s198 + $0xa0] sm:$0xff] %vm823, %v649
        %845 = vst.msk [vmem:[%s198 + $0xa8] sm:$0xff] %vm823, %v652
        %846 = vst.msk [vmem:[%s198 + $0xb0] sm:$0xff] %vm823, %v657
        %847 = vst.msk [vmem:[%s198 + $0xb8] sm:$0xff] %vm823, %v660
        %848 = vst.msk [vmem:[%s198 + $0xc0] sm:$0xff] %vm823, %v665
        %849 = vst.msk [vmem:[%s198 + $0xc8] sm:$0xff] %vm823, %v668
        %850 = vst.msk [vmem:[%s198 + $0xd0] sm:$0xff] %vm823, %v673
        %851 = vst.msk [vmem:[%s198 + $0xd8] sm:$0xff] %vm823, %v676
        %852 = vst.msk [vmem:[%s198 + $0xe0] sm:$0xff] %vm823, %v681
        %853 = vst.msk [vmem:[%s198 + $0xe8] sm:$0xff] %vm823, %v684
        %854 = vst.msk [vmem:[%s198 + $0xf0] sm:$0xff] %vm823, %v689
        %855 = vst.msk [vmem:[%s198 + $0xf8] sm:$0xff] %vm823, %v692
        %856 = vst.msk [vmem:[%s198 + $0x100] sm:$0xff] %vm823, %v697
        %857 = vst.msk [vmem:[%s198 + $0x108] sm:$0xff] %vm823, %v700
        %858 = vst.msk [vmem:[%s198 + $0x110] sm:$0xff] %vm823, %v705
        %859 = vst.msk [vmem:[%s198 + $0x118] sm:$0xff] %vm823, %v708
        %860 = vst.msk [vmem:[%s198 + $0x120] sm:$0xff] %vm823, %v713
        %861 = vst.msk [vmem:[%s198 + $0x128] sm:$0xff] %vm823, %v716
        %862 = vst.msk [vmem:[%s198 + $0x130] sm:$0xff] %vm823, %v721
        %863 = vst.msk [vmem:[%s198 + $0x138] sm:$0xff] %vm823, %v724
        %864 = vst.msk [vmem:[%s198 + $0x140] sm:$0xff] %vm823, %v729
        %865 = vst.msk [vmem:[%s198 + $0x148] sm:$0xff] %vm823, %v732
        %866 = vst.msk [vmem:[%s198 + $0x150] sm:$0xff] %vm823, %v737
        %867 = vst.msk [vmem:[%s198 + $0x158] sm:$0xff] %vm823, %v740
        %868 = vst.msk [vmem:[%s198 + $0x160] sm:$0xff] %vm823, %v745
        %869 = vst.msk [vmem:[%s198 + $0x168] sm:$0xff] %vm823, %v748
        %870 = vst.msk [vmem:[%s198 + $0x170] sm:$0xff] %vm823, %v753
        %871 = vst.msk [vmem:[%s198 + $0x178] sm:$0xff] %vm823, %v756
        %872 = vst.msk [vmem:[%s198 + $0x180] sm:$0xff] %vm823, %v761
        %873 = vst.msk [vmem:[%s198 + $0x188] sm:$0xff] %vm823, %v764
        %874 = vst.msk [vmem:[%s198 + $0x190] sm:$0xff] %vm823, %v769
        %875 = vst.msk [vmem:[%s198 + $0x198] sm:$0xff] %vm823, %v772
        %876 = vst.msk [vmem:[%s198 + $0x1a0] sm:$0xff] %vm823, %v777
        %877 = vst.msk [vmem:[%s198 + $0x1a8] sm:$0xff] %vm823, %v780
        %878 = vst.msk [vmem:[%s198 + $0x1b0] sm:$0xff] %vm823, %v785
        %879 = vst.msk [vmem:[%s198 + $0x1b8] sm:$0xff] %vm823, %v788
        %880 = vst.msk [vmem:[%s198 + $0x1c0] sm:$0xff] %vm823, %v793
        %881 = vst.msk [vmem:[%s198 + $0x1c8] sm:$0xff] %vm823, %v796
        %882 = vst.msk [vmem:[%s198 + $0x1d0] sm:$0xff] %vm823, %v801
        %883 = vst.msk [vmem:[%s198 + $0x1d8] sm:$0xff] %vm823, %v804
        %884 = vst.msk [vmem:[%s198 + $0x1e0] sm:$0xff] %vm823, %v809
        %885 = vst.msk [vmem:[%s198 + $0x1e8] sm:$0xff] %vm823, %v812
        %886 = vst.msk [vmem:[%s198 + $0x1f0] sm:$0xff] %vm823, %v817
        %887 = vst.msk [vmem:[%s198 + $0x1f8] sm:$0xff] %vm823, %v820
        %s888 = smul.u32 64, %s16
        %p889 = scmp.lt.s32.totalorder %s888, 511
        %s890 = scalar_select %p889, %s888, 511
        %s891 = smul.addr %s890, 8
        %s892 = scalar_lea.vmem %s3, %s891
        // Predicated region
        $region41: #{tpu_custom_call.1} parent=31 // pred_check
          %p893 = pneg %p102
        $region42: #{tpu_custom_call.1} parent=31 // pred_check_branch
          %895 = sbr.rel (%p893) target = $region44
        $region43: #{tpu_custom_call.1} parent=31 // pred_region
          %s896 = smul.u32 64, %s16
        $region44: #{tpu_custom_call.1} parent=31 // pred_fallthru
          _
      $region32: #{tpu_custom_call.1} parent=5 // pred_fallthru
        _
      %p897 = scmp.le.s32.totalorder 2, %s11
      // Predicated region
      $region45: #{tpu_custom_call.1} parent=5 // pred_check
        %p898 = pneg %p897
      $region46: #{tpu_custom_call.1} parent=5 // pred_check_branch
        %900 = sbr.rel (%p898) target = $region48
      $region47: #{tpu_custom_call.1} parent=5 // pred_region
        %s901 = ssub.s32 %s11, 2
        // Predicated region
        $region49: #{tpu_custom_call.1} parent=47 // pred_check
          %p902 = pneg %p108
        $region50: #{tpu_custom_call.1} parent=47 // pred_check_branch
          %904 = sbr.rel (%p902) target = $region52
        $region51: #{tpu_custom_call.1} parent=47 // pred_region
          %s905 = smul.u32 64, %s17
          %p906 = scmp.lt.s32.totalorder %s905, 511
          %s907 = scalar_select %p906, %s905, 511
          %s908 = smul.addr %s907, 8
          %s909 = scalar_lea.vmem %s3, %s908
        $region52: #{tpu_custom_call.1} parent=47 // pred_fallthru
          _
      $region48: #{tpu_custom_call.1} parent=5 // pred_fallthru
        _
    $region6: #{tpu_custom_call.1} parent=1 // loop_footer
      %s15 = sadd.s32 1, %s11
    $region7: #{tpu_custom_call.1} parent=1 // loop_footer_branch
      %10 = sbr.rel target = $region3
    $region8: #{tpu_custom_call.1} parent=1 // loop_exit
      _
    %910 = vsyncpa [#allocation3], 1
    %s911 = scalar_lea.sflag [#allocation3], 1
    %912 = vsyncpa %s911, 1
    %913 = vsyncpa [#allocation5], 1

</llo_original>
